<compile_context>
chip_gen: v7x
topology: tpu7x:2x2x1
jax: 0.10.0
libtpu: 0.0.40
codegen_flags: <defaults>
</compile_context>

<pallas_src>
import jax
import jax.numpy as jnp
from jax.experimental import pallas as pl
from jax.experimental.pallas import tpu as pltpu

HIDDEN_SIZE = 32
INPUT_SIZE = 6
OUTPUT_SIZE = 2

LANES = 128
SUBLANES = 8


def _pad8(n):
    return ((n + SUBLANES - 1) // SUBLANES) * SUBLANES


# ---- packed parameter buffer layout (rows, 128), f32 ----
IP = _pad8(INPUT_SIZE)            # input dim padded to 8
H = HIDDEN_SIZE
R_WIH = 0                         # rows [0, IP)        cols [0, H)   : W_ih^T (zero-pad rows)
R_WHH = R_WIH + IP                # rows [IP, IP+H)     cols [0, H)   : W_hh^T
R_BIAS = R_WHH + H                # row  [R_BIAS]       cols [0, H)   : b_ih + b_hh
R_WFC = _pad8(R_BIAS + 1)         # rows [R_WFC, +H)    cols [0, 128) : W_fc^T (zero-pad cols)
R_BFC = R_WFC + H                 # row  [R_BFC]        cols [0, 128) : b_fc   (zero-pad cols)
R_TOTAL = _pad8(R_BFC + 1)


def pack_params(w_ih, w_hh, b_ih, b_hh, w_fc, b_fc):
    """One-time init: transpose / pad / coalesce all params into a single VMEM-friendly buffer."""
    h, i = w_ih.shape
    o = w_fc.shape[0]
    p = jnp.zeros((R_TOTAL, LANES), jnp.float32)
    p = p.at[R_WIH:R_WIH + i, :h].set(w_ih.T.astype(jnp.float32))
    p = p.at[R_WHH:R_WHH + h, :h].set(w_hh.T.astype(jnp.float32))
    p = p.at[R_BIAS, :h].set((b_ih + b_hh).astype(jnp.float32))
    p = p.at[R_WFC:R_WFC + h, :o].set(w_fc.T.astype(jnp.float32))
    p = p.at[R_BFC, :o].set(b_fc.astype(jnp.float32))
    return p


def rnn_kernel(x_ref, p_ref, out_ref):
    # x_ref:   (T*Bp, IP)  time-major rows, batch padded to Bp=8, input padded to IP=8
    # p_ref:   (R_TOTAL, 128) packed params (see layout above)
    # out_ref: (Bp, 128)   lane-dense output block; cols >= O are zero
    Bp = out_ref.shape[0]
    T = x_ref.shape[0] // Bp

    wih_t = p_ref[R_WIH:R_WIH + IP, :H]        # (IP, H)
    whh_t = p_ref[R_WHH:R_WHH + H, :H]         # (H, H)
    bias = p_ref[R_BIAS:R_BIAS + 1, :H]        # (1, H)
    wfc_t = p_ref[R_WFC:R_WFC + H, :]          # (H, 128)
    bfc = p_ref[R_BFC:R_BFC + 1, :]            # (1, 128)

    # Single batched input projection for ALL timesteps (off the serial critical path).
    xproj = (jnp.dot(x_ref[...], wih_t, preferred_element_type=jnp.float32)
             + bias)                            # (T*Bp, H)

    # Peeled t = 0: h_0 = 0 so the recurrent matmul vanishes.
    h = jnp.tanh(xproj[0:Bp, :])                # (Bp, H)

    # Fully unrolled recurrence (T static, small). Each step's critical path is one
    # (Bp,H)x(H,H) MXU matmul + EUP tanh; slices are 8-sublane aligned.
    # TODO(synk): for large T switch to lax.fori_loop(..., unroll=8) + an "arbitrary" grid
    # axis blocking xproj over T so VMEM stays bounded (v7x: 64 MiB).
    for t in range(1, T):
        pre = xproj[t * Bp:(t + 1) * Bp, :] + jnp.dot(h, whh_t,
                                                      preferred_element_type=jnp.float32)
        h = jnp.tanh(pre)

    # fc on the last hidden state; lane-dense (Bp, 128) store (padded cols are zero).
    out = jnp.dot(h, wfc_t, preferred_element_type=jnp.float32) + bfc
    out_ref[...] = out.astype(out_ref.dtype)


@jax.jit
def rnn_forward(x, packed_params):
    """x: (B, T, I) float32, packed_params from pack_params() -> (B, O) float32."""
    B, T, I = x.shape
    Bp = _pad8(B)

    # Only per-call layout work: time-major + zero-pad batch/input (fuses to one tiny copy).
    xt = jnp.swapaxes(x, 0, 1)                                   # (T, B, I)
    xp = jnp.zeros((T, Bp, IP), jnp.float32).at[:, :B, :I].set(xt)
    x_rows = xp.reshape(T * Bp, IP)                              # (T*Bp, IP)

    vmem = pltpu.MemorySpace.VMEM
    # Grid-less: whole problem is a few KiB of VMEM.
    # TODO(synk): for large B add a leading 'parallel' batch grid axis (shards across the
    # two v7x TensorCores) and budget tiles against 64 MiB VMEM with double-buffering.
    out_pad = pl.pallas_call(
        rnn_kernel,
        out_shape=jax.ShapeDtypeStruct((Bp, LANES), jnp.float32),
        in_specs=[pl.BlockSpec(memory_space=vmem),
                  pl.BlockSpec(memory_space=vmem)],
        out_specs=pl.BlockSpec(memory_space=vmem),
    )(x_rows, packed_params)

    return out_pad[:B, :OUTPUT_SIZE]


def rnn_reference(x, w_ih, w_hh, b_ih, b_hh, w_fc, b_fc):
    B, T, I = x.shape
    h = jnp.zeros((B, HIDDEN_SIZE), jnp.float32)
    for t in range(T):
        h = jnp.tanh(x[:, t, :] @ w_ih.T + b_ih + h @ w_hh.T + b_hh)
    return h @ w_fc.T + b_fc


if __name__ == "__main__":
    B, T = 2, 8
    key = jax.random.PRNGKey(0)
    kx, k1, k2, k3, k4, k5, k6 = jax.random.split(key, 7)

    # Same shapes as torch's nn.RNN / nn.Linear, uniform(-1/sqrt(H), 1/sqrt(H)) init.
    bound = 1.0 / jnp.sqrt(jnp.float32(HIDDEN_SIZE))
    w_ih = jax.random.uniform(k1, (HIDDEN_SIZE, INPUT_SIZE), jnp.float32, -bound, bound)
    w_hh = jax.random.uniform(k2, (HIDDEN_SIZE, HIDDEN_SIZE), jnp.float32, -bound, bound)
    b_ih = jax.random.uniform(k3, (HIDDEN_SIZE,), jnp.float32, -bound, bound)
    b_hh = jax.random.uniform(k4, (HIDDEN_SIZE,), jnp.float32, -bound, bound)
    w_fc = jax.random.uniform(k5, (OUTPUT_SIZE, HIDDEN_SIZE), jnp.float32, -bound, bound)
    b_fc = jax.random.uniform(k6, (OUTPUT_SIZE,), jnp.float32, -bound, bound)

    x = jax.random.normal(kx, (B, T, INPUT_SIZE), jnp.float32)

    # One-time parameter packing (transposes, bias sum, padding) -- not on the per-call path.
    packed = jax.block_until_ready(pack_params(w_ih, w_hh, b_ih, b_hh, w_fc, b_fc))

    out = rnn_forward(x, packed)
    out = jax.block_until_ready(out)

    ref = rnn_reference(x, w_ih, w_hh, b_ih, b_hh, w_fc, b_fc)
    assert out.shape == (B, OUTPUT_SIZE)
    assert jnp.allclose(out, ref, atol=1e-5, rtol=1e-5), (out, ref)

    print("KERNEL_OK")
</pallas_src>

<mosaic_0001>
module attributes {stable_mosaic.version = 11 : i64} {
  func.func @rnn_kernel(%arg0: memref<64x8xf32, #tpu.memory_space<vmem>>, %arg1: memref<88x128xf32, #tpu.memory_space<vmem>>, %arg2: memref<8x128xf32, #tpu.memory_space<vmem>>) attributes {dimension_semantics = [], scalar_prefetch = 0 : i64, scratch_operands = 0 : i64, tpu.core_type = #tpu.core_type<tc>} {
    %c0 = arith.constant 0 : index
    %c0_0 = arith.constant 0 : index
    %0 = vector.load %arg1[%c0, %c0_0] : memref<88x128xf32, #tpu.memory_space<vmem>>, vector<8x32xf32>
    %c8 = arith.constant 8 : index
    %c0_1 = arith.constant 0 : index
    %1 = vector.load %arg1[%c8, %c0_1] : memref<88x128xf32, #tpu.memory_space<vmem>>, vector<32x32xf32>
    %c40 = arith.constant 40 : index
    %c0_2 = arith.constant 0 : index
    %2 = vector.load %arg1[%c40, %c0_2] : memref<88x128xf32, #tpu.memory_space<vmem>>, vector<1x32xf32>
    %c48 = arith.constant 48 : index
    %c0_3 = arith.constant 0 : index
    %3 = vector.load %arg1[%c48, %c0_3] : memref<88x128xf32, #tpu.memory_space<vmem>>, vector<32x128xf32>
    %c80 = arith.constant 80 : index
    %c0_4 = arith.constant 0 : index
    %4 = vector.load %arg1[%c80, %c0_4] : memref<88x128xf32, #tpu.memory_space<vmem>>, vector<1x128xf32>
    %c0_5 = arith.constant 0 : index
    %c0_6 = arith.constant 0 : index
    %5 = vector.load %arg0[%c0_5, %c0_6] : memref<64x8xf32, #tpu.memory_space<vmem>>, vector<64x8xf32>
    %cst = arith.constant dense<0.000000e+00> : vector<64x32xf32>
    %6 = tpu.matmul %5, %0, %cst {dimension_numbers = #tpu.dot_dimension_numbers<[1], [0], [0], [1], [0, 0, 1, 1], [], []>} : vector<64x8xf32>, vector<8x32xf32>, vector<64x32xf32> -> vector<64x32xf32>
    %7 = vector.broadcast %2 : vector<1x32xf32> to vector<64x32xf32>
    %8 = arith.addf %6, %7 : vector<64x32xf32>
    %9 = vector.extract_strided_slice %8 {offsets = [0, 0], sizes = [8, 32], strides = [1, 1]} : vector<64x32xf32> to vector<8x32xf32>
    %10 = math.tanh %9 : vector<8x32xf32>
    %11 = vector.extract_strided_slice %8 {offsets = [8, 0], sizes = [8, 32], strides = [1, 1]} : vector<64x32xf32> to vector<8x32xf32>
    %cst_7 = arith.constant dense<0.000000e+00> : vector<8x32xf32>
    %12 = tpu.matmul %10, %1, %cst_7 {dimension_numbers = #tpu.dot_dimension_numbers<[1], [0], [0], [1], [0, 0, 1, 1], [], []>} : vector<8x32xf32>, vector<32x32xf32>, vector<8x32xf32> -> vector<8x32xf32>
    %13 = arith.addf %11, %12 : vector<8x32xf32>
    %14 = math.tanh %13 : vector<8x32xf32>
    %15 = vector.extract_strided_slice %8 {offsets = [16, 0], sizes = [8, 32], strides = [1, 1]} : vector<64x32xf32> to vector<8x32xf32>
    %cst_8 = arith.constant dense<0.000000e+00> : vector<8x32xf32>
    %16 = tpu.matmul %14, %1, %cst_8 {dimension_numbers = #tpu.dot_dimension_numbers<[1], [0], [0], [1], [0, 0, 1, 1], [], []>} : vector<8x32xf32>, vector<32x32xf32>, vector<8x32xf32> -> vector<8x32xf32>
    %17 = arith.addf %15, %16 : vector<8x32xf32>
    %18 = math.tanh %17 : vector<8x32xf32>
    %19 = vector.extract_strided_slice %8 {offsets = [24, 0], sizes = [8, 32], strides = [1, 1]} : vector<64x32xf32> to vector<8x32xf32>
    %cst_9 = arith.constant dense<0.000000e+00> : vector<8x32xf32>
    %20 = tpu.matmul %18, %1, %cst_9 {dimension_numbers = #tpu.dot_dimension_numbers<[1], [0], [0], [1], [0, 0, 1, 1], [], []>} : vector<8x32xf32>, vector<32x32xf32>, vector<8x32xf32> -> vector<8x32xf32>
    %21 = arith.addf %19, %20 : vector<8x32xf32>
    %22 = math.tanh %21 : vector<8x32xf32>
    %23 = vector.extract_strided_slice %8 {offsets = [32, 0], sizes = [8, 32], strides = [1, 1]} : vector<64x32xf32> to vector<8x32xf32>
    %cst_10 = arith.constant dense<0.000000e+00> : vector<8x32xf32>
    %24 = tpu.matmul %22, %1, %cst_10 {dimension_numbers = #tpu.dot_dimension_numbers<[1], [0], [0], [1], [0, 0, 1, 1], [], []>} : vector<8x32xf32>, vector<32x32xf32>, vector<8x32xf32> -> vector<8x32xf32>
    %25 = arith.addf %23, %24 : vector<8x32xf32>
    %26 = math.tanh %25 : vector<8x32xf32>
    %27 = vector.extract_strided_slice %8 {offsets = [40, 0], sizes = [8, 32], strides = [1, 1]} : vector<64x32xf32> to vector<8x32xf32>
    %cst_11 = arith.constant dense<0.000000e+00> : vector<8x32xf32>
    %28 = tpu.matmul %26, %1, %cst_11 {dimension_numbers = #tpu.dot_dimension_numbers<[1], [0], [0], [1], [0, 0, 1, 1], [], []>} : vector<8x32xf32>, vector<32x32xf32>, vector<8x32xf32> -> vector<8x32xf32>
    %29 = arith.addf %27, %28 : vector<8x32xf32>
    %30 = math.tanh %29 : vector<8x32xf32>
    %31 = vector.extract_strided_slice %8 {offsets = [48, 0], sizes = [8, 32], strides = [1, 1]} : vector<64x32xf32> to vector<8x32xf32>
    %cst_12 = arith.constant dense<0.000000e+00> : vector<8x32xf32>
    %32 = tpu.matmul %30, %1, %cst_12 {dimension_numbers = #tpu.dot_dimension_numbers<[1], [0], [0], [1], [0, 0, 1, 1], [], []>} : vector<8x32xf32>, vector<32x32xf32>, vector<8x32xf32> -> vector<8x32xf32>
    %33 = arith.addf %31, %32 : vector<8x32xf32>
    %34 = math.tanh %33 : vector<8x32xf32>
    %35 = vector.extract_strided_slice %8 {offsets = [56, 0], sizes = [8, 32], strides = [1, 1]} : vector<64x32xf32> to vector<8x32xf32>
    %cst_13 = arith.constant dense<0.000000e+00> : vector<8x32xf32>
    %36 = tpu.matmul %34, %1, %cst_13 {dimension_numbers = #tpu.dot_dimension_numbers<[1], [0], [0], [1], [0, 0, 1, 1], [], []>} : vector<8x32xf32>, vector<32x32xf32>, vector<8x32xf32> -> vector<8x32xf32>
    %37 = arith.addf %35, %36 : vector<8x32xf32>
    %38 = math.tanh %37 : vector<8x32xf32>
    %cst_14 = arith.constant dense<0.000000e+00> : vector<8x128xf32>
    %39 = tpu.matmul %38, %3, %cst_14 {dimension_numbers = #tpu.dot_dimension_numbers<[1], [0], [0], [1], [0, 0, 1, 1], [], []>} : vector<8x32xf32>, vector<32x128xf32>, vector<8x128xf32> -> vector<8x128xf32>
    %40 = vector.broadcast %4 : vector<1x128xf32> to vector<8x128xf32>
    %41 = arith.addf %39, %40 : vector<8x128xf32>
    %c0_15 = arith.constant 0 : index
    %c0_16 = arith.constant 0 : index
    %42 = vector.load %arg2[%c0_15, %c0_16] : memref<8x128xf32, #tpu.memory_space<vmem>>, vector<8x128xf32>
    tpu.vector_store %arg2[%c0_15, %c0_16], %41 {strides = array<i32>} : memref<8x128xf32, #tpu.memory_space<vmem>>, vector<8x128xf32>,
    return
  }
}

</mosaic_0001>

<llo_original>
// kernel: rnn_forward.1
$region0: #{rnn_forward.1}
  #allocation0 [shape = 'u32[]', space=smem, size = 0x4, offset = 0x4, fixed_abs, tag = 'smem constant byte address 0x4 - core index']
  #allocation1 [shape = 'u32[144,128]{1,0:T(1,128)}', space=vmem, size = 0x12000, scoped, tag = 'internal scratch']
  %s0 = inlined_call_operand.vmem [shape: f32[64,8], index: 0, kind: input, shape index: {}]
  %s1 = inlined_call_operand.vmem [shape: f32[88,128], index: 1, kind: input, shape index: {}]
  %s2 = inlined_call_operand.vmem [shape: f32[8,128], index: 2, kind: output, shape index: {}]
  %s3 = sld [smem:[#allocation0]]
  $region18: #{rnn_forward.1} parent=0
    _
  %s5 = ssub.s32 1, %s3
  %s6 = scalar_select 0, %s5, %s3
  // Predicated region
  $region2: #{rnn_forward.1} parent=0 // pred_check
    _
  $region3: #{rnn_forward.1} parent=0 // pred_check_branch
    %8 = sbr.rel (0) target = $region5
  $region4: #{rnn_forward.1} parent=0 // pred_region
    _
  $region5: #{rnn_forward.1} parent=0 // pred_fallthru
    _
  // Predicated region
  $region6: #{rnn_forward.1} parent=0 // pred_check
    _
  $region7: #{rnn_forward.1} parent=0 // pred_check_branch
    %10 = sbr.rel (0) target = $region9
  $region8: #{rnn_forward.1} parent=0 // pred_region
    _
  $region9: #{rnn_forward.1} parent=0 // pred_fallthru
    _
  %v11 = vld [vmem:[%s1] sm:$0xff]
  %v12 = vld [vmem:[%s1 + $0x8] sm:$0xff]
  %v13 = vld [vmem:[%s1 + $0x10] sm:$0xff]
  %v14 = vld [vmem:[%s1 + $0x18] sm:$0xff]
  %v15 = vld [vmem:[%s1 + $0x20] sm:$0xff]
  %v16 = vld [vmem:[%s1 + $0x28] sm:$0x1]
  %v17 = vld [vmem:[%s1 + $0x30] sm:$0xff]
  %v18 = vld [vmem:[%s1 + $0x38] sm:$0xff]
  %v19 = vld [vmem:[%s1 + $0x40] sm:$0xff]
  %v20 = vld [vmem:[%s1 + $0x48] sm:$0xff]
  %v21 = vld [vmem:[%s1 + $0x50] sm:$0x1]
  %v22 = vld [vmem:[%s0] sm:$0xff]
  %v23 = vld [vmem:[%s0 + $0x8] sm:$0xff]
  %v24 = vld [vmem:[%s0 + $0x10] sm:$0xff]
  %v25 = vld [vmem:[%s0 + $0x18] sm:$0xff]
  %v26 = vld [vmem:[%s0 + $0x20] sm:$0xff]
  %v27 = vld [vmem:[%s0 + $0x28] sm:$0xff]
  %v28 = vld [vmem:[%s0 + $0x30] sm:$0xff]
  %v29 = vld [vmem:[%s0 + $0x38] sm:$0xff]
  %v30 = vlaneseq
  %v31 = vshrl.u32 %v30, 7
  %v32 = vsub.s32 0, %v31
  %v33 = vrot.slane %v16, %v32
  %vm34 = vcmask 64512
  %v36 = vsel %vm34, %v22, 0
  %v39 = vsel %vm34, %v23, 0
  %v42 = vsel %vm34, %v24, 0
  %v45 = vsel %vm34, %v25, 0
  %v48 = vsel %vm34, %v26, 0
  %v51 = vsel %vm34, %v27, 0
  %v54 = vsel %vm34, %v28, 0
  %v57 = vsel %vm34, %v29, 0
  %59 = vmatprep.subr.mxu0 0.0
  %60 = vmatpush1.msra.mxu0 %v11
  %61 = vmatprep.subr.mxu0 0.0
  %62 = vmatpush1.msra.mxu0 0.0
  %63 = vmatprep.subr.mxu0 0.0
  %64 = vmatpush1.msra.mxu0 0.0
  %65 = vmatprep.subr.mxu0 0.0
  %66 = vmatpush1.msra.mxu0 0.0
  %67 = vmatprep.subr.mxu0 0.0
  %68 = vmatpush1.msra.mxu0 0.0
  %69 = vmatprep.subr.mxu0 0.0
  %70 = vmatpush1.msra.mxu0 0.0
  %71 = vmatprep.subr.mxu0 0.0
  %72 = vmatpush1.msra.mxu0 0.0
  %73 = vmatprep.subr.mxu0 0.0
  %74 = vmatpush1.msra.mxu0 0.0
  %75 = vmatprep.subr.mxu0 0.0
  %76 = vmatpush1.msra.mxu0 0.0
  %77 = vmatprep.subr.mxu0 0.0
  %78 = vmatpush1.msra.mxu0 0.0
  %79 = vmatprep.subr.mxu0 0.0
  %80 = vmatpush1.msra.mxu0 0.0
  %81 = vmatprep.subr.mxu0 0.0
  %82 = vmatpush1.msra.mxu0 0.0
  %83 = vmatprep.subr.mxu0 0.0
  %84 = vmatpush1.msra.mxu0 0.0
  %85 = vmatprep.subr.mxu0 0.0
  %86 = vmatpush1.msra.mxu0 0.0
  %87 = vmatprep.subr.mxu0 0.0
  %88 = vmatpush1.msra.mxu0 0.0
  %89 = vmatprep.subr.mxu0 0.0
  %90 = vmatpush1.msra.mxu0 0.0
  %91 = vmatprep.subr.mxu0 0.0
  %92 = vmatpush1.msra.mxu0 0.0
  %93 = vmatprep.subr.mxu0 0.0
  %94 = vmatpush1.msra.mxu0 0.0
  %95 = vmatprep.subr.mxu0 0.0
  %96 = vmatpush1.msra.mxu0 0.0
  %97 = vmatprep.subr.mxu0 0.0
  %98 = vmatpush1.msra.mxu0 0.0
  %99 = vmatprep.subr.mxu0 0.0
  %100 = vmatpush1.msra.mxu0 0.0
  %101 = vmatprep.subr.mxu0 0.0
  %102 = vmatpush1.msra.mxu0 0.0
  %103 = vmatprep.subr.mxu0 0.0
  %104 = vmatpush1.msra.mxu0 0.0
  %105 = vmatprep.subr.mxu0 0.0
  %106 = vmatpush1.msra.mxu0 0.0
  %107 = vmatprep.subr.mxu0 0.0
  %108 = vmatpush1.msra.mxu0 0.0
  %109 = vmatprep.subr.mxu0 0.0
  %110 = vmatpush1.msra.mxu0 0.0
  %111 = vmatprep.subr.mxu0 0.0
  %112 = vmatpush1.msra.mxu0 0.0
  %113 = vmatprep.subr.mxu0 0.0
  %114 = vmatpush1.msra.mxu0 0.0
  %115 = vmatprep.subr.mxu0 0.0
  %116 = vmatpush1.msra.mxu0 0.0
  %117 = vmatprep.subr.mxu0 0.0
  %118 = vmatpush1.msra.mxu0 0.0
  %119 = vmatprep.subr.mxu0 0.0
  %120 = vmatpush1.msra.mxu0 0.0
  %121 = vmatprep.subr.mxu0 0.0
  %122 = vmatpush1.msra.mxu0 0.0
  %123 = vmatprep.mubr.f32.mxu0 0.0
  %124 = vmatmul.mubr.f32.gmra.mrb[0].mxu0 %v36
  %v125 = vpop.f32.mrb[0].mxu0
  %v126 = vadd.f32 %v33, %v125
  %v127 = vpop.f32.mrb[0].mxu0
  %128 = vmatprep.mubr.f32.mxu0 0.0
  %129 = vmatmul.mubr.f32.gmra.mrb[0].mxu0 %v39
  %v130 = vpop.f32.mrb[0].mxu0
  %v131 = vadd.f32 %v33, %v130
  %v132 = vpop.f32.mrb[0].mxu0
  %133 = vmatprep.mubr.f32.mxu0 0.0
  %134 = vmatmul.mubr.f32.gmra.mrb[0].mxu0 %v42
  %v135 = vpop.f32.mrb[0].mxu0
  %v136 = vadd.f32 %v33, %v135
  %v137 = vpop.f32.mrb[0].mxu0
  %138 = vmatprep.mubr.f32.mxu0 0.0
  %139 = vmatmul.mubr.f32.gmra.mrb[0].mxu0 %v45
  %v140 = vpop.f32.mrb[0].mxu0
  %v141 = vadd.f32 %v33, %v140
  %v142 = vpop.f32.mrb[0].mxu0
  %143 = vmatprep.mubr.f32.mxu0 0.0
  %144 = vmatmul.mubr.f32.gmra.mrb[0].mxu0 %v48
  %v145 = vpop.f32.mrb[0].mxu0
  %v146 = vadd.f32 %v33, %v145
  %v147 = vpop.f32.mrb[0].mxu0
  %148 = vmatprep.mubr.f32.mxu0 0.0
  %149 = vmatmul.mubr.f32.gmra.mrb[0].mxu0 %v51
  %v150 = vpop.f32.mrb[0].mxu0
  %v151 = vadd.f32 %v33, %v150
  %v152 = vpop.f32.mrb[0].mxu0
  %153 = vmatprep.mubr.f32.mxu0 0.0
  %154 = vmatmul.mubr.f32.gmra.mrb[0].mxu0 %v54
  %v155 = vpop.f32.mrb[0].mxu0
  %v156 = vadd.f32 %v33, %v155
  %v157 = vpop.f32.mrb[0].mxu0
  %158 = vmatprep.mubr.f32.mxu0 0.0
  %159 = vmatmul.mubr.f32.gmra.mrb[0].mxu0 %v57
  %v160 = vpop.f32.mrb[0].mxu0
  %v161 = vadd.f32 %v33, %v160
  %v162 = vpop.f32.mrb[0].mxu0
  %163 = vdwg.mxu0
  %v164 = vtanh.pop %v126
  %vm165 = vcmask 261120
  %v167 = vsel %vm165, %v164, 0
  %169 = vmatprep.subr.mxu0 0.0
  %170 = vmatpush1.msra.mxu0 %v12
  %171 = vmatprep.subr.mxu0 0.0
  %172 = vmatpush1.msra.mxu0 %v13
  %173 = vmatprep.subr.mxu0 0.0
  %174 = vmatpush1.msra.mxu0 %v14
  %175 = vmatprep.subr.mxu0 0.0
  %176 = vmatpush1.msra.mxu0 %v15
  %177 = vmatprep.subr.mxu0 0.0
  %178 = vmatpush1.msra.mxu0 0.0
  %179 = vmatprep.subr.mxu0 0.0
  %180 = vmatpush1.msra.mxu0 0.0
  %181 = vmatprep.subr.mxu0 0.0
  %182 = vmatpush1.msra.mxu0 0.0
  %183 = vmatprep.subr.mxu0 0.0
  %184 = vmatpush1.msra.mxu0 0.0
  %185 = vmatprep.subr.mxu0 0.0
  %186 = vmatpush1.msra.mxu0 0.0
  %187 = vmatprep.subr.mxu0 0.0
  %188 = vmatpush1.msra.mxu0 0.0
  %189 = vmatprep.subr.mxu0 0.0
  %190 = vmatpush1.msra.mxu0 0.0
  %191 = vmatprep.subr.mxu0 0.0
  %192 = vmatpush1.msra.mxu0 0.0
  %193 = vmatprep.subr.mxu0 0.0
  %194 = vmatpush1.msra.mxu0 0.0
  %195 = vmatprep.subr.mxu0 0.0
  %196 = vmatpush1.msra.mxu0 0.0
  %197 = vmatprep.subr.mxu0 0.0
  %198 = vmatpush1.msra.mxu0 0.0
  %199 = vmatprep.subr.mxu0 0.0
  %200 = vmatpush1.msra.mxu0 0.0
  %201 = vmatprep.subr.mxu0 0.0
  %202 = vmatpush1.msra.mxu0 0.0
  %203 = vmatprep.subr.mxu0 0.0
  %204 = vmatpush1.msra.mxu0 0.0
  %205 = vmatprep.subr.mxu0 0.0
  %206 = vmatpush1.msra.mxu0 0.0
  %207 = vmatprep.subr.mxu0 0.0
  %208 = vmatpush1.msra.mxu0 0.0
  %209 = vmatprep.subr.mxu0 0.0
  %210 = vmatpush1.msra.mxu0 0.0
  %211 = vmatprep.subr.mxu0 0.0
  %212 = vmatpush1.msra.mxu0 0.0
  %213 = vmatprep.subr.mxu0 0.0
  %214 = vmatpush1.msra.mxu0 0.0
  %215 = vmatprep.subr.mxu0 0.0
  %216 = vmatpush1.msra.mxu0 0.0
  %217 = vmatprep.subr.mxu0 0.0
  %218 = vmatpush1.msra.mxu0 0.0
  %219 = vmatprep.subr.mxu0 0.0
  %220 = vmatpush1.msra.mxu0 0.0
  %221 = vmatprep.subr.mxu0 0.0
  %222 = vmatpush1.msra.mxu0 0.0
  %223 = vmatprep.subr.mxu0 0.0
  %224 = vmatpush1.msra.mxu0 0.0
  %225 = vmatprep.subr.mxu0 0.0
  %226 = vmatpush1.msra.mxu0 0.0
  %227 = vmatprep.subr.mxu0 0.0
  %228 = vmatpush1.msra.mxu0 0.0
  %229 = vmatprep.subr.mxu0 0.0
  %230 = vmatpush1.msra.mxu0 0.0
  %231 = vmatprep.subr.mxu0 0.0
  %232 = vmatpush1.msra.mxu0 0.0
  %233 = vmatprep.mubr.f32.mxu0 0.0
  %234 = vmatmul.mubr.f32.gmra.mrb[0].mxu0 %v167
  %v235 = vpop.f32.mrb[0].mxu0
  %v236 = vadd.f32 0.0, %v235
  %v237 = vpop.f32.mrb[0].mxu0
  %238 = vdwg.mxu0
  %v239 = vadd.f32 %v131, %v236
  %v240 = vtanh.pop %v239
  %v242 = vsel %vm165, %v240, 0
  %244 = vmatprep.subr.mxu0 0.0
  %245 = vmatpush1.msra.mxu0 %v12
  %246 = vmatprep.subr.mxu0 0.0
  %247 = vmatpush1.msra.mxu0 %v13
  %248 = vmatprep.subr.mxu0 0.0
  %249 = vmatpush1.msra.mxu0 %v14
  %250 = vmatprep.subr.mxu0 0.0
  %251 = vmatpush1.msra.mxu0 %v15
  %252 = vmatprep.subr.mxu0 0.0
  %253 = vmatpush1.msra.mxu0 0.0
  %254 = vmatprep.subr.mxu0 0.0
  %255 = vmatpush1.msra.mxu0 0.0
  %256 = vmatprep.subr.mxu0 0.0
  %257 = vmatpush1.msra.mxu0 0.0
  %258 = vmatprep.subr.mxu0 0.0
  %259 = vmatpush1.msra.mxu0 0.0
  %260 = vmatprep.subr.mxu0 0.0
  %261 = vmatpush1.msra.mxu0 0.0
  %262 = vmatprep.subr.mxu0 0.0
  %263 = vmatpush1.msra.mxu0 0.0
  %264 = vmatprep.subr.mxu0 0.0
  %265 = vmatpush1.msra.mxu0 0.0
  %266 = vmatprep.subr.mxu0 0.0
  %267 = vmatpush1.msra.mxu0 0.0
  %268 = vmatprep.subr.mxu0 0.0
  %269 = vmatpush1.msra.mxu0 0.0
  %270 = vmatprep.subr.mxu0 0.0
  %271 = vmatpush1.msra.mxu0 0.0
  %272 = vmatprep.subr.mxu0 0.0
  %273 = vmatpush1.msra.mxu0 0.0
  %274 = vmatprep.subr.mxu0 0.0
  %275 = vmatpush1.msra.mxu0 0.0
  %276 = vmatprep.subr.mxu0 0.0
  %277 = vmatpush1.msra.mxu0 0.0
  %278 = vmatprep.subr.mxu0 0.0
  %279 = vmatpush1.msra.mxu0 0.0
  %280 = vmatprep.subr.mxu0 0.0
  %281 = vmatpush1.msra.mxu0 0.0
  %282 = vmatprep.subr.mxu0 0.0
  %283 = vmatpush1.msra.mxu0 0.0
  %284 = vmatprep.subr.mxu0 0.0
  %285 = vmatpush1.msra.mxu0 0.0
  %286 = vmatprep.subr.mxu0 0.0
  %287 = vmatpush1.msra.mxu0 0.0
  %288 = vmatprep.subr.mxu0 0.0
  %289 = vmatpush1.msra.mxu0 0.0
  %290 = vmatprep.subr.mxu0 0.0
  %291 = vmatpush1.msra.mxu0 0.0
  %292 = vmatprep.subr.mxu0 0.0
  %293 = vmatpush1.msra.mxu0 0.0
  %294 = vmatprep.subr.mxu0 0.0
  %295 = vmatpush1.msra.mxu0 0.0
  %296 = vmatprep.subr.mxu0 0.0
  %297 = vmatpush1.msra.mxu0 0.0
  %298 = vmatprep.subr.mxu0 0.0
  %299 = vmatpush1.msra.mxu0 0.0
  %300 = vmatprep.subr.mxu0 0.0
  %301 = vmatpush1.msra.mxu0 0.0
  %302 = vmatprep.subr.mxu0 0.0
  %303 = vmatpush1.msra.mxu0 0.0
  %304 = vmatprep.subr.mxu0 0.0
  %305 = vmatpush1.msra.mxu0 0.0
  %306 = vmatprep.subr.mxu0 0.0
  %307 = vmatpush1.msra.mxu0 0.0
  %308 = vmatprep.mubr.f32.mxu0 0.0
  %309 = vmatmul.mubr.f32.gmra.mrb[0].mxu0 %v242
  %v310 = vpop.f32.mrb[0].mxu0
  %v311 = vadd.f32 0.0, %v310
  %v312 = vpop.f32.mrb[0].mxu0
  %313 = vdwg.mxu0
  %v314 = vadd.f32 %v136, %v311
  %v315 = vtanh.pop %v314
  %v317 = vsel %vm165, %v315, 0
  %319 = vmatprep.subr.mxu0 0.0
  %320 = vmatpush1.msra.mxu0 %v12
  %321 = vmatprep.subr.mxu0 0.0
  %322 = vmatpush1.msra.mxu0 %v13
  %323 = vmatprep.subr.mxu0 0.0
  %324 = vmatpush1.msra.mxu0 %v14
  %325 = vmatprep.subr.mxu0 0.0
  %326 = vmatpush1.msra.mxu0 %v15
  %327 = vmatprep.subr.mxu0 0.0
  %328 = vmatpush1.msra.mxu0 0.0
  %329 = vmatprep.subr.mxu0 0.0
  %330 = vmatpush1.msra.mxu0 0.0
  %331 = vmatprep.subr.mxu0 0.0
  %332 = vmatpush1.msra.mxu0 0.0
  %333 = vmatprep.subr.mxu0 0.0
  %334 = vmatpush1.msra.mxu0 0.0
  %335 = vmatprep.subr.mxu0 0.0
  %336 = vmatpush1.msra.mxu0 0.0
  %337 = vmatprep.subr.mxu0 0.0
  %338 = vmatpush1.msra.mxu0 0.0
  %339 = vmatprep.subr.mxu0 0.0
  %340 = vmatpush1.msra.mxu0 0.0
  %341 = vmatprep.subr.mxu0 0.0
  %342 = vmatpush1.msra.mxu0 0.0
  %343 = vmatprep.subr.mxu0 0.0
  %344 = vmatpush1.msra.mxu0 0.0
  %345 = vmatprep.subr.mxu0 0.0
  %346 = vmatpush1.msra.mxu0 0.0
  %347 = vmatprep.subr.mxu0 0.0
  %348 = vmatpush1.msra.mxu0 0.0
  %349 = vmatprep.subr.mxu0 0.0
  %350 = vmatpush1.msra.mxu0 0.0
  %351 = vmatprep.subr.mxu0 0.0
  %352 = vmatpush1.msra.mxu0 0.0
  %353 = vmatprep.subr.mxu0 0.0
  %354 = vmatpush1.msra.mxu0 0.0
  %355 = vmatprep.subr.mxu0 0.0
  %356 = vmatpush1.msra.mxu0 0.0
  %357 = vmatprep.subr.mxu0 0.0
  %358 = vmatpush1.msra.mxu0 0.0
  %359 = vmatprep.subr.mxu0 0.0
  %360 = vmatpush1.msra.mxu0 0.0
  %361 = vmatprep.subr.mxu0 0.0
  %362 = vmatpush1.msra.mxu0 0.0
  %363 = vmatprep.subr.mxu0 0.0
  %364 = vmatpush1.msra.mxu0 0.0
  %365 = vmatprep.subr.mxu0 0.0
  %366 = vmatpush1.msra.mxu0 0.0
  %367 = vmatprep.subr.mxu0 0.0
  %368 = vmatpush1.msra.mxu0 0.0
  %369 = vmatprep.subr.mxu0 0.0
  %370 = vmatpush1.msra.mxu0 0.0
  %371 = vmatprep.subr.mxu0 0.0
  %372 = vmatpush1.msra.mxu0 0.0
  %373 = vmatprep.subr.mxu0 0.0
  %374 = vmatpush1.msra.mxu0 0.0
  %375 = vmatprep.subr.mxu0 0.0
  %376 = vmatpush1.msra.mxu0 0.0
  %377 = vmatprep.subr.mxu0 0.0
  %378 = vmatpush1.msra.mxu0 0.0
  %379 = vmatprep.subr.mxu0 0.0
  %380 = vmatpush1.msra.mxu0 0.0
  %381 = vmatprep.subr.mxu0 0.0
  %382 = vmatpush1.msra.mxu0 0.0
  %383 = vmatprep.mubr.f32.mxu0 0.0
  %384 = vmatmul.mubr.f32.gmra.mrb[0].mxu0 %v317
  %v385 = vpop.f32.mrb[0].mxu0
  %v386 = vadd.f32 0.0, %v385
  %v387 = vpop.f32.mrb[0].mxu0
  %388 = vdwg.mxu0
  %v389 = vadd.f32 %v141, %v386
  %v390 = vtanh.pop %v389
  %v392 = vsel %vm165, %v390, 0
  %394 = vmatprep.subr.mxu0 0.0
  %395 = vmatpush1.msra.mxu0 %v12
  %396 = vmatprep.subr.mxu0 0.0
  %397 = vmatpush1.msra.mxu0 %v13
  %398 = vmatprep.subr.mxu0 0.0
  %399 = vmatpush1.msra.mxu0 %v14
  %400 = vmatprep.subr.mxu0 0.0
  %401 = vmatpush1.msra.mxu0 %v15
  %402 = vmatprep.subr.mxu0 0.0
  %403 = vmatpush1.msra.mxu0 0.0
  %404 = vmatprep.subr.mxu0 0.0
  %405 = vmatpush1.msra.mxu0 0.0
  %406 = vmatprep.subr.mxu0 0.0
  %407 = vmatpush1.msra.mxu0 0.0
  %408 = vmatprep.subr.mxu0 0.0
  %409 = vmatpush1.msra.mxu0 0.0
  %410 = vmatprep.subr.mxu0 0.0
  %411 = vmatpush1.msra.mxu0 0.0
  %412 = vmatprep.subr.mxu0 0.0
  %413 = vmatpush1.msra.mxu0 0.0
  %414 = vmatprep.subr.mxu0 0.0
  %415 = vmatpush1.msra.mxu0 0.0
  %416 = vmatprep.subr.mxu0 0.0
  %417 = vmatpush1.msra.mxu0 0.0
  %418 = vmatprep.subr.mxu0 0.0
  %419 = vmatpush1.msra.mxu0 0.0
  %420 = vmatprep.subr.mxu0 0.0
  %421 = vmatpush1.msra.mxu0 0.0
  %422 = vmatprep.subr.mxu0 0.0
  %423 = vmatpush1.msra.mxu0 0.0
  %424 = vmatprep.subr.mxu0 0.0
  %425 = vmatpush1.msra.mxu0 0.0
  %426 = vmatprep.subr.mxu0 0.0
  %427 = vmatpush1.msra.mxu0 0.0
  %428 = vmatprep.subr.mxu0 0.0
  %429 = vmatpush1.msra.mxu0 0.0
  %430 = vmatprep.subr.mxu0 0.0
  %431 = vmatpush1.msra.mxu0 0.0
  %432 = vmatprep.subr.mxu0 0.0
  %433 = vmatpush1.msra.mxu0 0.0
  %434 = vmatprep.subr.mxu0 0.0
  %435 = vmatpush1.msra.mxu0 0.0
  %436 = vmatprep.subr.mxu0 0.0
  %437 = vmatpush1.msra.mxu0 0.0
  %438 = vmatprep.subr.mxu0 0.0
  %439 = vmatpush1.msra.mxu0 0.0
  %440 = vmatprep.subr.mxu0 0.0
  %441 = vmatpush1.msra.mxu0 0.0
  %442 = vmatprep.subr.mxu0 0.0
  %443 = vmatpush1.msra.mxu0 0.0
  %444 = vmatprep.subr.mxu0 0.0
  %445 = vmatpush1.msra.mxu0 0.0
  %446 = vmatprep.subr.mxu0 0.0
  %447 = vmatpush1.msra.mxu0 0.0
  %448 = vmatprep.subr.mxu0 0.0
  %449 = vmatpush1.msra.mxu0 0.0
  %450 = vmatprep.subr.mxu0 0.0
  %451 = vmatpush1.msra.mxu0 0.0
  %452 = vmatprep.subr.mxu0 0.0
  %453 = vmatpush1.msra.mxu0 0.0
  %454 = vmatprep.subr.mxu0 0.0
  %455 = vmatpush1.msra.mxu0 0.0
  %456 = vmatprep.subr.mxu0 0.0
  %457 = vmatpush1.msra.mxu0 0.0
  %458 = vmatprep.mubr.f32.mxu0 0.0
  %459 = vmatmul.mubr.f32.gmra.mrb[0].mxu0 %v392
  %v460 = vpop.f32.mrb[0].mxu0
  %v461 = vadd.f32 0.0, %v460
  %v462 = vpop.f32.mrb[0].mxu0
  %463 = vdwg.mxu0
  %v464 = vadd.f32 %v146, %v461
  %v465 = vtanh.pop %v464
  %v467 = vsel %vm165, %v465, 0
  %469 = vmatprep.subr.mxu0 0.0
  %470 = vmatpush1.msra.mxu0 %v12
  %471 = vmatprep.subr.mxu0 0.0
  %472 = vmatpush1.msra.mxu0 %v13
  %473 = vmatprep.subr.mxu0 0.0
  %474 = vmatpush1.msra.mxu0 %v14
  %475 = vmatprep.subr.mxu0 0.0
  %476 = vmatpush1.msra.mxu0 %v15
  %477 = vmatprep.subr.mxu0 0.0
  %478 = vmatpush1.msra.mxu0 0.0
  %479 = vmatprep.subr.mxu0 0.0
  %480 = vmatpush1.msra.mxu0 0.0
  %481 = vmatprep.subr.mxu0 0.0
  %482 = vmatpush1.msra.mxu0 0.0
  %483 = vmatprep.subr.mxu0 0.0
  %484 = vmatpush1.msra.mxu0 0.0
  %485 = vmatprep.subr.mxu0 0.0
  %486 = vmatpush1.msra.mxu0 0.0
  %487 = vmatprep.subr.mxu0 0.0
  %488 = vmatpush1.msra.mxu0 0.0
  %489 = vmatprep.subr.mxu0 0.0
  %490 = vmatpush1.msra.mxu0 0.0
  %491 = vmatprep.subr.mxu0 0.0
  %492 = vmatpush1.msra.mxu0 0.0
  %493 = vmatprep.subr.mxu0 0.0
  %494 = vmatpush1.msra.mxu0 0.0
  %495 = vmatprep.subr.mxu0 0.0
  %496 = vmatpush1.msra.mxu0 0.0
  %497 = vmatprep.subr.mxu0 0.0
  %498 = vmatpush1.msra.mxu0 0.0
  %499 = vmatprep.subr.mxu0 0.0
  %500 = vmatpush1.msra.mxu0 0.0
  %501 = vmatprep.subr.mxu0 0.0
  %502 = vmatpush1.msra.mxu0 0.0
  %503 = vmatprep.subr.mxu0 0.0
  %504 = vmatpush1.msra.mxu0 0.0
  %505 = vmatprep.subr.mxu0 0.0
  %506 = vmatpush1.msra.mxu0 0.0
  %507 = vmatprep.subr.mxu0 0.0
  %508 = vmatpush1.msra.mxu0 0.0
  %509 = vmatprep.subr.mxu0 0.0
  %510 = vmatpush1.msra.mxu0 0.0
  %511 = vmatprep.subr.mxu0 0.0
  %512 = vmatpush1.msra.mxu0 0.0
  %513 = vmatprep.subr.mxu0 0.0
  %514 = vmatpush1.msra.mxu0 0.0
  %515 = vmatprep.subr.mxu0 0.0
  %516 = vmatpush1.msra.mxu0 0.0
  %517 = vmatprep.subr.mxu0 0.0
  %518 = vmatpush1.msra.mxu0 0.0
  %519 = vmatprep.subr.mxu0 0.0
  %520 = vmatpush1.msra.mxu0 0.0
  %521 = vmatprep.subr.mxu0 0.0
  %522 = vmatpush1.msra.mxu0 0.0
  %523 = vmatprep.subr.mxu0 0.0
  %524 = vmatpush1.msra.mxu0 0.0
  %525 = vmatprep.subr.mxu0 0.0
  %526 = vmatpush1.msra.mxu0 0.0
  %527 = vmatprep.subr.mxu0 0.0
  %528 = vmatpush1.msra.mxu0 0.0
  %529 = vmatprep.subr.mxu0 0.0
  %530 = vmatpush1.msra.mxu0 0.0
  %531 = vmatprep.subr.mxu0 0.0
  %532 = vmatpush1.msra.mxu0 0.0
  %533 = vmatprep.mubr.f32.mxu0 0.0
  %534 = vmatmul.mubr.f32.gmra.mrb[0].mxu0 %v467
  %v535 = vpop.f32.mrb[0].mxu0
  %v536 = vadd.f32 0.0, %v535
  %v537 = vpop.f32.mrb[0].mxu0
  %538 = vdwg.mxu0
  %v539 = vadd.f32 %v151, %v536
  %v540 = vtanh.pop %v539
  %v542 = vsel %vm165, %v540, 0
  %544 = vmatprep.subr.mxu0 0.0
  %545 = vmatpush1.msra.mxu0 %v12
  %546 = vmatprep.subr.mxu0 0.0
  %547 = vmatpush1.msra.mxu0 %v13
  %548 = vmatprep.subr.mxu0 0.0
  %549 = vmatpush1.msra.mxu0 %v14
  %550 = vmatprep.subr.mxu0 0.0
  %551 = vmatpush1.msra.mxu0 %v15
  %552 = vmatprep.subr.mxu0 0.0
  %553 = vmatpush1.msra.mxu0 0.0
  %554 = vmatprep.subr.mxu0 0.0
  %555 = vmatpush1.msra.mxu0 0.0
  %556 = vmatprep.subr.mxu0 0.0
  %557 = vmatpush1.msra.mxu0 0.0
  %558 = vmatprep.subr.mxu0 0.0
  %559 = vmatpush1.msra.mxu0 0.0
  %560 = vmatprep.subr.mxu0 0.0
  %561 = vmatpush1.msra.mxu0 0.0
  %562 = vmatprep.subr.mxu0 0.0
  %563 = vmatpush1.msra.mxu0 0.0
  %564 = vmatprep.subr.mxu0 0.0
  %565 = vmatpush1.msra.mxu0 0.0
  %566 = vmatprep.subr.mxu0 0.0
  %567 = vmatpush1.msra.mxu0 0.0
  %568 = vmatprep.subr.mxu0 0.0
  %569 = vmatpush1.msra.mxu0 0.0
  %570 = vmatprep.subr.mxu0 0.0
  %571 = vmatpush1.msra.mxu0 0.0
  %572 = vmatprep.subr.mxu0 0.0
  %573 = vmatpush1.msra.mxu0 0.0
  %574 = vmatprep.subr.mxu0 0.0
  %575 = vmatpush1.msra.mxu0 0.0
  %576 = vmatprep.subr.mxu0 0.0
  %577 = vmatpush1.msra.mxu0 0.0
  %578 = vmatprep.subr.mxu0 0.0
  %579 = vmatpush1.msra.mxu0 0.0
  %580 = vmatprep.subr.mxu0 0.0
  %581 = vmatpush1.msra.mxu0 0.0
  %582 = vmatprep.subr.mxu0 0.0
  %583 = vmatpush1.msra.mxu0 0.0
  %584 = vmatprep.subr.mxu0 0.0
  %585 = vmatpush1.msra.mxu0 0.0
  %586 = vmatprep.subr.mxu0 0.0
  %587 = vmatpush1.msra.mxu0 0.0
  %588 = vmatprep.subr.mxu0 0.0
  %589 = vmatpush1.msra.mxu0 0.0
  %590 = vmatprep.subr.mxu0 0.0
  %591 = vmatpush1.msra.mxu0 0.0
  %592 = vmatprep.subr.mxu0 0.0
  %593 = vmatpush1.msra.mxu0 0.0
  %594 = vmatprep.subr.mxu0 0.0
  %595 = vmatpush1.msra.mxu0 0.0
  %596 = vmatprep.subr.mxu0 0.0
  %597 = vmatpush1.msra.mxu0 0.0
  %598 = vmatprep.subr.mxu0 0.0
  %599 = vmatpush1.msra.mxu0 0.0
  %600 = vmatprep.subr.mxu0 0.0
  %601 = vmatpush1.msra.mxu0 0.0
  %602 = vmatprep.subr.mxu0 0.0
  %603 = vmatpush1.msra.mxu0 0.0
  %604 = vmatprep.subr.mxu0 0.0
  %605 = vmatpush1.msra.mxu0 0.0
  %606 = vmatprep.subr.mxu0 0.0
  %607 = vmatpush1.msra.mxu0 0.0
  %608 = vmatprep.mubr.f32.mxu0 0.0
  %609 = vmatmul.mubr.f32.gmra.mrb[0].mxu0 %v542
  %v610 = vpop.f32.mrb[0].mxu0
  %v611 = vadd.f32 0.0, %v610
  %v612 = vpop.f32.mrb[0].mxu0
  %613 = vdwg.mxu0
  %v614 = vadd.f32 %v156, %v611
  %v615 = vtanh.pop %v614
  %v617 = vsel %vm165, %v615, 0
  %619 = vmatprep.subr.mxu0 0.0
  %620 = vmatpush1.msra.mxu0 %v12
  %621 = vmatprep.subr.mxu0 0.0
  %622 = vmatpush1.msra.mxu0 %v13
  %623 = vmatprep.subr.mxu0 0.0
  %624 = vmatpush1.msra.mxu0 %v14
  %625 = vmatprep.subr.mxu0 0.0
  %626 = vmatpush1.msra.mxu0 %v15
  %627 = vmatprep.subr.mxu0 0.0
  %628 = vmatpush1.msra.mxu0 0.0
  %629 = vmatprep.subr.mxu0 0.0
  %630 = vmatpush1.msra.mxu0 0.0
  %631 = vmatprep.subr.mxu0 0.0
  %632 = vmatpush1.msra.mxu0 0.0
  %633 = vmatprep.subr.mxu0 0.0
  %634 = vmatpush1.msra.mxu0 0.0
  %635 = vmatprep.subr.mxu0 0.0
  %636 = vmatpush1.msra.mxu0 0.0
  %637 = vmatprep.subr.mxu0 0.0
  %638 = vmatpush1.msra.mxu0 0.0
  %639 = vmatprep.subr.mxu0 0.0
  %640 = vmatpush1.msra.mxu0 0.0
  %641 = vmatprep.subr.mxu0 0.0
  %642 = vmatpush1.msra.mxu0 0.0
  %643 = vmatprep.subr.mxu0 0.0
  %644 = vmatpush1.msra.mxu0 0.0
  %645 = vmatprep.subr.mxu0 0.0
  %646 = vmatpush1.msra.mxu0 0.0
  %647 = vmatprep.subr.mxu0 0.0
  %648 = vmatpush1.msra.mxu0 0.0
  %649 = vmatprep.subr.mxu0 0.0
  %650 = vmatpush1.msra.mxu0 0.0
  %651 = vmatprep.subr.mxu0 0.0
  %652 = vmatpush1.msra.mxu0 0.0
  %653 = vmatprep.subr.mxu0 0.0
  %654 = vmatpush1.msra.mxu0 0.0
  %655 = vmatprep.subr.mxu0 0.0
  %656 = vmatpush1.msra.mxu0 0.0
  %657 = vmatprep.subr.mxu0 0.0
  %658 = vmatpush1.msra.mxu0 0.0
  %659 = vmatprep.subr.mxu0 0.0
  %660 = vmatpush1.msra.mxu0 0.0
  %661 = vmatprep.subr.mxu0 0.0
  %662 = vmatpush1.msra.mxu0 0.0
  %663 = vmatprep.subr.mxu0 0.0
  %664 = vmatpush1.msra.mxu0 0.0
  %665 = vmatprep.subr.mxu0 0.0
  %666 = vmatpush1.msra.mxu0 0.0
  %667 = vmatprep.subr.mxu0 0.0
  %668 = vmatpush1.msra.mxu0 0.0
  %669 = vmatprep.subr.mxu0 0.0
  %670 = vmatpush1.msra.mxu0 0.0
  %671 = vmatprep.subr.mxu0 0.0
  %672 = vmatpush1.msra.mxu0 0.0
  %673 = vmatprep.subr.mxu0 0.0
  %674 = vmatpush1.msra.mxu0 0.0
  %675 = vmatprep.subr.mxu0 0.0
  %676 = vmatpush1.msra.mxu0 0.0
  %677 = vmatprep.subr.mxu0 0.0
  %678 = vmatpush1.msra.mxu0 0.0
  %679 = vmatprep.subr.mxu0 0.0
  %680 = vmatpush1.msra.mxu0 0.0
  %681 = vmatprep.subr.mxu0 0.0
  %682 = vmatpush1.msra.mxu0 0.0
  %683 = vmatprep.mubr.f32.mxu0 0.0
  %684 = vmatmul.mubr.f32.gmra.mrb[0].mxu0 %v617
  %v685 = vpop.f32.mrb[0].mxu0
  %v686 = vadd.f32 0.0, %v685
  %v687 = vpop.f32.mrb[0].mxu0
  %688 = vdwg.mxu0
  %v689 = vadd.f32 %v161, %v686
  %v690 = vtanh.pop %v689
  %v691 = vlaneseq
  %v692 = vshrl.u32 %v691, 7
  %v693 = vsub.s32 0, %v692
  %v694 = vrot.slane %v21, %v693
  %v696 = vsel %vm165, %v690, 0
  %698 = vmatprep.subr.mxu0 0.0
  %699 = vmatpush1.msra.mxu0 %v17
  %700 = vmatprep.subr.mxu0 0.0
  %701 = vmatpush1.msra.mxu0 %v18
  %702 = vmatprep.subr.mxu0 0.0
  %703 = vmatpush1.msra.mxu0 %v19
  %704 = vmatprep.subr.mxu0 0.0
  %705 = vmatpush1.msra.mxu0 %v20
  %706 = vmatprep.subr.mxu0 0.0
  %707 = vmatpush1.msra.mxu0 0.0
  %708 = vmatprep.subr.mxu0 0.0
  %709 = vmatpush1.msra.mxu0 0.0
  %710 = vmatprep.subr.mxu0 0.0
  %711 = vmatpush1.msra.mxu0 0.0
  %712 = vmatprep.subr.mxu0 0.0
  %713 = vmatpush1.msra.mxu0 0.0
  %714 = vmatprep.subr.mxu0 0.0
  %715 = vmatpush1.msra.mxu0 0.0
  %716 = vmatprep.subr.mxu0 0.0
  %717 = vmatpush1.msra.mxu0 0.0
  %718 = vmatprep.subr.mxu0 0.0
  %719 = vmatpush1.msra.mxu0 0.0
  %720 = vmatprep.subr.mxu0 0.0
  %721 = vmatpush1.msra.mxu0 0.0
  %722 = vmatprep.subr.mxu0 0.0
  %723 = vmatpush1.msra.mxu0 0.0
  %724 = vmatprep.subr.mxu0 0.0
  %725 = vmatpush1.msra.mxu0 0.0
  %726 = vmatprep.subr.mxu0 0.0
  %727 = vmatpush1.msra.mxu0 0.0
  %728 = vmatprep.subr.mxu0 0.0
  %729 = vmatpush1.msra.mxu0 0.0
  %730 = vmatprep.subr.mxu0 0.0
  %731 = vmatpush1.msra.mxu0 0.0
  %732 = vmatprep.subr.mxu0 0.0
  %733 = vmatpush1.msra.mxu0 0.0
  %734 = vmatprep.subr.mxu0 0.0
  %735 = vmatpush1.msra.mxu0 0.0
  %736 = vmatprep.subr.mxu0 0.0
  %737 = vmatpush1.msra.mxu0 0.0
  %738 = vmatprep.subr.mxu0 0.0
  %739 = vmatpush1.msra.mxu0 0.0
  %740 = vmatprep.subr.mxu0 0.0
  %741 = vmatpush1.msra.mxu0 0.0
  %742 = vmatprep.subr.mxu0 0.0
  %743 = vmatpush1.msra.mxu0 0.0
  %744 = vmatprep.subr.mxu0 0.0
  %745 = vmatpush1.msra.mxu0 0.0
  %746 = vmatprep.subr.mxu0 0.0
  %747 = vmatpush1.msra.mxu0 0.0
  %748 = vmatprep.subr.mxu0 0.0
  %749 = vmatpush1.msra.mxu0 0.0
  %750 = vmatprep.subr.mxu0 0.0
  %751 = vmatpush1.msra.mxu0 0.0
  %752 = vmatprep.subr.mxu0 0.0
  %753 = vmatpush1.msra.mxu0 0.0
  %754 = vmatprep.subr.mxu0 0.0
  %755 = vmatpush1.msra.mxu0 0.0
  %756 = vmatprep.subr.mxu0 0.0
  %757 = vmatpush1.msra.mxu0 0.0
  %758 = vmatprep.subr.mxu0 0.0
  %759 = vmatpush1.msra.mxu0 0.0
  %760 = vmatprep.subr.mxu0 0.0
  %761 = vmatpush1.msra.mxu0 0.0
  %762 = vmatprep.mubr.f32.mxu0 0.0
  %763 = vmatmul.mubr.f32.gmra.mrb[0].mxu0 %v696
  %v764 = vpop.f32.mrb[0].mxu0
  %v765 = vadd.f32 %v694, %v764
  %v766 = vpop.f32.mrb[0].mxu0
  %767 = vdwg.mxu0
  %768 = vst [vmem:[%s2] sm:$0xff] %v765
  // Predicated region
  $region10: #{rnn_forward.1} parent=0 // pred_check
    _
  $region11: #{rnn_forward.1} parent=0 // pred_check_branch
    %770 = sbr.rel (0) target = $region13
  $region12: #{rnn_forward.1} parent=0 // pred_region
    _
  $region13: #{rnn_forward.1} parent=0 // pred_fallthru
    _
  // Predicated region
  $region14: #{rnn_forward.1} parent=0 // pred_check
    _
  $region15: #{rnn_forward.1} parent=0 // pred_check_branch
    %772 = sbr.rel (0) target = $region17
  $region16: #{rnn_forward.1} parent=0 // pred_region
    _
  $region17: #{rnn_forward.1} parent=0 // pred_fallthru
    _

</llo_original>
